<compile_context>
chip_gen: v7x
topology: tpu7x:2x2x1
jax: 0.10.0
libtpu: 0.0.40
codegen_flags: <defaults>
</compile_context>

<pallas_src>
import functools

import jax
import jax.numpy as jnp
from jax import lax
from jax.experimental import pallas as pl
from jax.experimental.pallas import tpu as pltpu

KH, KW = 3, 3


def resblock_kernel(x_ref, w1_ref, w2_ref, shift_ref, mask_ref, out_ref, *,
                    H, W, clip, clip_val):
    """One grid step == B_tile images packed on sublanes.

    Row layout: row = b*C + c (image b, channel c); lanes = H*W pixels.
    """
    HW = H * W

    xin = x_ref[...].astype(jnp.float32)      # (R, HW) — also the residual
    w1 = w1_ref[...]                          # (R, 9R), BN1 scale folded, MXU dtype
    w2 = w2_ref[...]                          # (R, 9R), BN2 scale folded, MXU dtype
    shifts = shift_ref[...]                   # (R, 2) f32: [:,0]=BN1 shift, [:,1]=BN2
    masks = mask_ref[...]                     # (8, HW) f32 border masks (no centre)

    def conv3x3(h, w_stacked):
        taps = []
        m = 0
        for ky in range(KH):
            for kx in range(KW):
                if ky == 1 and kx == 1:
                    taps.append(h)                       # centre: no roll, no mask
                    continue
                delta = (ky - 1) * W + (kx - 1)          # flat neighbour offset
                # rolled[p] == h[(p + delta) % HW]; rolls are per-row along lanes,
                # so each packed (image, channel) row behaves like a single image.
                shifted = pltpu.roll(h, (-delta) % HW, 1)
                taps.append(shifted * masks[m:m + 1, :])  # zero out-of-image taps
                m += 1
        # Fuse the 9 taps into ONE MXU matmul: contraction over (tap, image, cin).
        rhs = jnp.concatenate(taps, axis=0).astype(w_stacked.dtype)   # (9R, HW)
        return jnp.dot(w_stacked, rhs, preferred_element_type=jnp.float32)

    # Conv-1 -> (folded) Norm-1 -> ReLU
    h1 = jnp.maximum(conv3x3(xin, w1) + shifts[:, 0:1], 0.0)
    # Conv-2 -> (folded) Norm-2
    h2 = conv3x3(h1, w2) + shifts[:, 1:2]

    # Residual add (optional clip; static python flag = ResBlock.clip)
    res = jnp.clip(xin, -1.0, clip_val) if clip else xin
    out_ref[...] = (res + h2).astype(out_ref.dtype)


def fold_bn(gamma, beta, mean, var, eps=1e-5):
    scale = gamma / jnp.sqrt(var + eps)
    shift = beta - mean * scale
    return scale, shift


def _border_masks(H, W):
    """(8, H*W) f32 masks (centre tap omitted): 1 where the (ky,kx) neighbour is
    inside the image — reproduces zero SAME padding exactly with the roll trick."""
    ys = jnp.arange(H, dtype=jnp.int32).reshape(H, 1)
    xs = jnp.arange(W, dtype=jnp.int32).reshape(1, W)
    rows = []
    for ky in range(KH):
        for kx in range(KW):
            if ky == 1 and kx == 1:
                continue
            dy, dx = ky - 1, kx - 1
            valid = ((ys + dy >= 0) & (ys + dy < H) &
                     (xs + dx >= 0) & (xs + dx < W))
            rows.append(valid.astype(jnp.float32).reshape(H * W))
    return jnp.stack(rows, axis=0)


def _pick_batch_tile(N, C, max_rows=32):
    """Largest divisor of N whose packed row count B_tile*C fills whole 8-row sublane
    tiles (keeps the fused-RHS concat tile-aligned) while keeping the block-diagonal
    fused contraction dim 9*B_tile*C modest."""
    best = 1
    for d in range(1, N + 1):
        if N % d:
            continue
        rows = d * C
        if rows > max(max_rows, C):
            continue
        if rows % 8 == 0 or rows == N * C or C % 8 == 0:
            best = d
    return best


def resblock_forward(x_nchw, params, clip=False, clip_val=0.0, eps=1e-5,
                     mxu_dtype=jnp.bfloat16, batch_tile=None):
    # x_nchw: (N, C, H, W), PyTorch convention.
    N, C, H, W = x_nchw.shape
    HW = H * W
    B_tile = batch_tile if batch_tile is not None else _pick_batch_tile(N, C)
    assert N % B_tile == 0, "batch tile must divide N"
    R = B_tile * C                              # sublane rows per grid step

    # Packed-rows layout: row n*C + c <-> (image n, channel c); lanes = H*W.
    # This reshape is free (no transpose, no padding, no duplicated residual copy).
    x_rows = x_nchw.reshape(N * C, HW)

    scale1, shift1 = fold_bn(params['gamma1'], params['beta1'],
                             params['mean1'], params['var1'], eps)
    scale2, shift2 = fold_bn(params['gamma2'], params['beta2'],
                             params['mean2'], params['var2'], eps)

    eye = jnp.eye(B_tile, dtype=jnp.float32)

    def stacked_weights(w_oihw, scale):
        # (Cout,Cin,KH,KW) -> per-tap (9,Cout,Cin), BN scale folded in f32, then made
        # block-diagonal over the B_tile packed images and concatenated along the
        # contraction axis in tap order — matching the kernel's stacked RHS layout.
        w = jnp.transpose(w_oihw.astype(jnp.float32), (2, 3, 0, 1)).reshape(KH * KW, C, C)
        w = w * scale.reshape(1, C, 1)                            # fold BN scale (f32)
        blocks = [jnp.kron(eye, w[t]) for t in range(KH * KW)]    # each (R, R)
        return jnp.concatenate(blocks, axis=1).astype(mxu_dtype)  # (R, 9R)

    w1s = stacked_weights(params['w1'], scale1)
    w2s = stacked_weights(params['w2'], scale2)

    shifts = jnp.stack([jnp.tile(shift1.astype(jnp.float32), B_tile),
                        jnp.tile(shift2.astype(jnp.float32), B_tile)], axis=1)  # (R, 2)
    masks = _border_masks(H, W)                                   # (8, HW) f32

    kernel = functools.partial(resblock_kernel, H=H, W=W,
                               clip=bool(clip), clip_val=float(clip_val))

    out_rows = pl.pallas_call(
        kernel,
        out_shape=jax.ShapeDtypeStruct((N * C, HW), x_nchw.dtype),
        grid_spec=pltpu.PrefetchScalarGridSpec(
            num_scalar_prefetch=0,
            grid=(N // B_tile,),
            in_specs=[
                pl.BlockSpec((R, HW), lambda i: (i, 0)),              # x (and residual)
                pl.BlockSpec((R, KH * KW * R), lambda i: (0, 0)),     # fused conv1*bn1
                pl.BlockSpec((R, KH * KW * R), lambda i: (0, 0)),     # fused conv2*bn2
                pl.BlockSpec((R, 2), lambda i: (0, 0)),               # bn shifts
                pl.BlockSpec((KH * KW - 1, HW), lambda i: (0, 0)),    # border masks
            ],
            out_specs=pl.BlockSpec((R, HW), lambda i: (i, 0)),
        ),
        compiler_params=pltpu.CompilerParams(
            dimension_semantics=("parallel",),
            vmem_limit_bytes=48 * 1024 * 1024,   # > 16/32 MiB defaults, < v7x 64 MiB
        ),
    )(x_rows, w1s, w2s, shifts, masks)

    return out_rows.reshape(N, C, H, W)


def resblock_reference(x_nchw, params, clip=False, clip_val=0.0, eps=1e-5):
    """Pure-JAX reference matching the PyTorch forward (eval-mode BN, bias=False)."""
    def conv(h, w):  # w: (Cout, Cin, KH, KW)
        return lax.conv_general_dilated(
            h, w, window_strides=(1, 1), padding='SAME',
            dimension_numbers=('NCHW', 'OIHW', 'NCHW'))

    def bn(h, g, b, m, v):
        inv = 1.0 / jnp.sqrt(v + eps)
        return ((h - m[None, :, None, None]) * (g * inv)[None, :, None, None]
                + b[None, :, None, None])

    h = conv(x_nchw.astype(jnp.float32), params['w1'])
    h = bn(h, params['gamma1'], params['beta1'], params['mean1'], params['var1'])
    h = jnp.maximum(h, 0.0)
    h = conv(h, params['w2'])
    h = bn(h, params['gamma2'], params['beta2'], params['mean2'], params['var2'])
    res = jnp.clip(x_nchw, -1.0, clip_val) if clip else x_nchw
    return res + h


if __name__ == "__main__":
    N, C, H, W = 2, 4, 16, 16          # input_shape = (4, 16, 16), batch = 2
    key = jax.random.PRNGKey(0)
    keys = jax.random.split(key, 9)

    x = jax.random.normal(keys[0], (N, C, H, W), dtype=jnp.float32)

    params = {
        'w1': 0.1 * jax.random.normal(keys[1], (C, C, KH, KW), dtype=jnp.float32),
        'w2': 0.1 * jax.random.normal(keys[2], (C, C, KH, KW), dtype=jnp.float32),
        'gamma1': jax.random.uniform(keys[3], (C,), minval=0.5, maxval=1.5),
        'beta1': 0.1 * jax.random.normal(keys[4], (C,)),
        'mean1': 0.1 * jax.random.normal(keys[5], (C,)),
        'var1': jax.random.uniform(keys[6], (C,), minval=0.5, maxval=1.5),
        'gamma2': jax.random.uniform(keys[7], (C,), minval=0.5, maxval=1.5),
        'beta2': 0.1 * jax.random.normal(keys[8], (C,)),
        'mean2': jnp.zeros((C,), jnp.float32),
        'var2': jnp.ones((C,), jnp.float32),
    }

    ref = resblock_reference(x, params)
    ref_c = resblock_reference(x, params, clip=True, clip_val=0.5)

    # 1) Structural exactness: f32 MXU operands must match the conv reference tightly.
    out_f32 = jax.block_until_ready(resblock_forward(x, params, mxu_dtype=jnp.float32))
    assert out_f32.shape == (N, C, H, W)
    assert jnp.allclose(out_f32, ref, atol=2e-4, rtol=2e-4), "f32 mismatch vs reference"

    out_f32_c = jax.block_until_ready(
        resblock_forward(x, params, clip=True, clip_val=0.5, mxu_dtype=jnp.float32))
    assert jnp.allclose(out_f32_c, ref_c, atol=2e-4, rtol=2e-4), "f32 clip mismatch"

    # 2) Default fast path: bf16 MXU operands, f32 accumulation + f32 elementwise.
    out_bf16 = jax.block_until_ready(resblock_forward(x, params))
    assert jnp.allclose(out_bf16, ref, atol=5e-2, rtol=5e-2), "bf16 mismatch vs reference"

    out_bf16_c = jax.block_until_ready(
        resblock_forward(x, params, clip=True, clip_val=0.5))
    assert jnp.allclose(out_bf16_c, ref_c, atol=5e-2, rtol=5e-2), "bf16 clip mismatch"

    print("KERNEL_OK")
</pallas_src>

<mosaic_0001>
module attributes {stable_mosaic.version = 11 : i64} {
  func.func @resblock_kernel(%arg0: i32, %arg1: memref<8x256xf32, #tpu.memory_space<vmem>>, %arg2: memref<8x72xf32, #tpu.memory_space<vmem>>, %arg3: memref<8x72xf32, #tpu.memory_space<vmem>>, %arg4: memref<8x2xf32, #tpu.memory_space<vmem>>, %arg5: memref<8x256xf32, #tpu.memory_space<vmem>>, %arg6: memref<8x256xf32, #tpu.memory_space<vmem>>) attributes {dimension_semantics = [#tpu.dimension_semantics<parallel>], iteration_bounds = array<i64: 1>, scalar_prefetch = 0 : i64, scratch_operands = 0 : i64, tpu.core_type = #tpu.core_type<tc>, window_params = [{transform_indices = @transform_0, window_bounds = array<i64: 8, 256>}, {pipeline_mode = #tpu.pipeline_mode<synchronous>, transform_indices = @transform_1, window_bounds = array<i64: 8, 72>}, {pipeline_mode = #tpu.pipeline_mode<synchronous>, transform_indices = @transform_2, window_bounds = array<i64: 8, 72>}, {pipeline_mode = #tpu.pipeline_mode<synchronous>, transform_indices = @transform_3, window_bounds = array<i64: 8, 2>}, {pipeline_mode = #tpu.pipeline_mode<synchronous>, transform_indices = @transform_4, window_bounds = array<i64: 8, 256>}, {transform_indices = @transform_5, window_bounds = array<i64: 8, 256>}]} {
    %c0 = arith.constant 0 : index
    %c0_0 = arith.constant 0 : index
    %0 = vector.load %arg1[%c0, %c0_0] : memref<8x256xf32, #tpu.memory_space<vmem>>, vector<8x256xf32>
    %c0_1 = arith.constant 0 : index
    %c0_2 = arith.constant 0 : index
    %1 = vector.load %arg2[%c0_1, %c0_2] : memref<8x72xf32, #tpu.memory_space<vmem>>, vector<8x72xf32>
    %c0_3 = arith.constant 0 : index
    %c0_4 = arith.constant 0 : index
    %2 = vector.load %arg3[%c0_3, %c0_4] : memref<8x72xf32, #tpu.memory_space<vmem>>, vector<8x72xf32>
    %c0_5 = arith.constant 0 : index
    %c0_6 = arith.constant 0 : index
    %3 = vector.load %arg4[%c0_5, %c0_6] : memref<8x2xf32, #tpu.memory_space<vmem>>, vector<8x2xf32>
    %c0_7 = arith.constant 0 : index
    %c0_8 = arith.constant 0 : index
    %4 = vector.load %arg5[%c0_7, %c0_8] : memref<8x256xf32, #tpu.memory_space<vmem>>, vector<8x256xf32>
    %c17_i32 = arith.constant 17 : i32
    %5 = tpu.dynamic_rotate %0 by %c17_i32 dim 1 : vector<8x256xf32>, i32 -> vector<8x256xf32>
    %6 = vector.extract_strided_slice %4 {offsets = [0, 0], sizes = [1, 256], strides = [1, 1]} : vector<8x256xf32> to vector<1x256xf32>
    %7 = vector.broadcast %6 : vector<1x256xf32> to vector<8x256xf32>
    %8 = arith.mulf %5, %7 : vector<8x256xf32>
    %c16_i32 = arith.constant 16 : i32
    %9 = tpu.dynamic_rotate %0 by %c16_i32 dim 1 : vector<8x256xf32>, i32 -> vector<8x256xf32>
    %10 = vector.extract_strided_slice %4 {offsets = [1, 0], sizes = [1, 256], strides = [1, 1]} : vector<8x256xf32> to vector<1x256xf32>
    %11 = vector.broadcast %10 : vector<1x256xf32> to vector<8x256xf32>
    %12 = arith.mulf %9, %11 : vector<8x256xf32>
    %c15_i32 = arith.constant 15 : i32
    %13 = tpu.dynamic_rotate %0 by %c15_i32 dim 1 : vector<8x256xf32>, i32 -> vector<8x256xf32>
    %14 = vector.extract_strided_slice %4 {offsets = [2, 0], sizes = [1, 256], strides = [1, 1]} : vector<8x256xf32> to vector<1x256xf32>
    %15 = vector.broadcast %14 : vector<1x256xf32> to vector<8x256xf32>
    %16 = arith.mulf %13, %15 : vector<8x256xf32>
    %c1_i32 = arith.constant 1 : i32
    %17 = tpu.dynamic_rotate %0 by %c1_i32 dim 1 : vector<8x256xf32>, i32 -> vector<8x256xf32>
    %18 = vector.extract_strided_slice %4 {offsets = [3, 0], sizes = [1, 256], strides = [1, 1]} : vector<8x256xf32> to vector<1x256xf32>
    %19 = vector.broadcast %18 : vector<1x256xf32> to vector<8x256xf32>
    %20 = arith.mulf %17, %19 : vector<8x256xf32>
    %c255_i32 = arith.constant 255 : i32
    %21 = tpu.dynamic_rotate %0 by %c255_i32 dim 1 : vector<8x256xf32>, i32 -> vector<8x256xf32>
    %22 = vector.extract_strided_slice %4 {offsets = [4, 0], sizes = [1, 256], strides = [1, 1]} : vector<8x256xf32> to vector<1x256xf32>
    %23 = vector.broadcast %22 : vector<1x256xf32> to vector<8x256xf32>
    %24 = arith.mulf %21, %23 : vector<8x256xf32>
    %c241_i32 = arith.constant 241 : i32
    %25 = tpu.dynamic_rotate %0 by %c241_i32 dim 1 : vector<8x256xf32>, i32 -> vector<8x256xf32>
    %26 = vector.extract_strided_slice %4 {offsets = [5, 0], sizes = [1, 256], strides = [1, 1]} : vector<8x256xf32> to vector<1x256xf32>
    %27 = vector.broadcast %26 : vector<1x256xf32> to vector<8x256xf32>
    %28 = arith.mulf %25, %27 : vector<8x256xf32>
    %c240_i32 = arith.constant 240 : i32
    %29 = tpu.dynamic_rotate %0 by %c240_i32 dim 1 : vector<8x256xf32>, i32 -> vector<8x256xf32>
    %30 = vector.extract_strided_slice %4 {offsets = [6, 0], sizes = [1, 256], strides = [1, 1]} : vector<8x256xf32> to vector<1x256xf32>
    %31 = vector.broadcast %30 : vector<1x256xf32> to vector<8x256xf32>
    %32 = arith.mulf %29, %31 : vector<8x256xf32>
    %c239_i32 = arith.constant 239 : i32
    %33 = tpu.dynamic_rotate %0 by %c239_i32 dim 1 : vector<8x256xf32>, i32 -> vector<8x256xf32>
    %34 = vector.extract_strided_slice %4 {offsets = [7, 0], sizes = [1, 256], strides = [1, 1]} : vector<8x256xf32> to vector<1x256xf32>
    %35 = vector.broadcast %34 : vector<1x256xf32> to vector<8x256xf32>
    %36 = arith.mulf %33, %35 : vector<8x256xf32>
    %37 = tpu.concatenate %8, %12, %16, %20, %0, %24, %28, %32, %36 in 0 : vector<8x256xf32>, vector<8x256xf32>, vector<8x256xf32>, vector<8x256xf32>, vector<8x256xf32>, vector<8x256xf32>, vector<8x256xf32>, vector<8x256xf32>, vector<8x256xf32> -> vector<72x256xf32>
    %cst = arith.constant dense<0.000000e+00> : vector<8x256xf32>
    %38 = tpu.matmul %1, %37, %cst {dimension_numbers = #tpu.dot_dimension_numbers<[1], [0], [0], [1], [0, 0, 1, 1], [], []>} : vector<8x72xf32>, vector<72x256xf32>, vector<8x256xf32> -> vector<8x256xf32>
    %39 = vector.extract_strided_slice %3 {offsets = [0, 0], sizes = [8, 1], strides = [1, 1]} : vector<8x2xf32> to vector<8x1xf32>
    %40 = vector.broadcast %39 : vector<8x1xf32> to vector<8x256xf32>
    %41 = arith.addf %38, %40 : vector<8x256xf32>
    %cst_9 = arith.constant 0.000000e+00 : f32
    %42 = vector.broadcast %cst_9 : f32 to vector<8x256xf32>
    %43 = arith.maximumf %41, %42 : vector<8x256xf32>
    %c17_i32_10 = arith.constant 17 : i32
    %44 = tpu.dynamic_rotate %43 by %c17_i32_10 dim 1 : vector<8x256xf32>, i32 -> vector<8x256xf32>
    %45 = vector.extract_strided_slice %4 {offsets = [0, 0], sizes = [1, 256], strides = [1, 1]} : vector<8x256xf32> to vector<1x256xf32>
    %46 = vector.broadcast %45 : vector<1x256xf32> to vector<8x256xf32>
    %47 = arith.mulf %44, %46 : vector<8x256xf32>
    %c16_i32_11 = arith.constant 16 : i32
    %48 = tpu.dynamic_rotate %43 by %c16_i32_11 dim 1 : vector<8x256xf32>, i32 -> vector<8x256xf32>
    %49 = vector.extract_strided_slice %4 {offsets = [1, 0], sizes = [1, 256], strides = [1, 1]} : vector<8x256xf32> to vector<1x256xf32>
    %50 = vector.broadcast %49 : vector<1x256xf32> to vector<8x256xf32>
    %51 = arith.mulf %48, %50 : vector<8x256xf32>
    %c15_i32_12 = arith.constant 15 : i32
    %52 = tpu.dynamic_rotate %43 by %c15_i32_12 dim 1 : vector<8x256xf32>, i32 -> vector<8x256xf32>
    %53 = vector.extract_strided_slice %4 {offsets = [2, 0], sizes = [1, 256], strides = [1, 1]} : vector<8x256xf32> to vector<1x256xf32>
    %54 = vector.broadcast %53 : vector<1x256xf32> to vector<8x256xf32>
    %55 = arith.mulf %52, %54 : vector<8x256xf32>
    %c1_i32_13 = arith.constant 1 : i32
    %56 = tpu.dynamic_rotate %43 by %c1_i32_13 dim 1 : vector<8x256xf32>, i32 -> vector<8x256xf32>
    %57 = vector.extract_strided_slice %4 {offsets = [3, 0], sizes = [1, 256], strides = [1, 1]} : vector<8x256xf32> to vector<1x256xf32>
    %58 = vector.broadcast %57 : vector<1x256xf32> to vector<8x256xf32>
    %59 = arith.mulf %56, %58 : vector<8x256xf32>
    %c255_i32_14 = arith.constant 255 : i32
    %60 = tpu.dynamic_rotate %43 by %c255_i32_14 dim 1 : vector<8x256xf32>, i32 -> vector<8x256xf32>
    %61 = vector.extract_strided_slice %4 {offsets = [4, 0], sizes = [1, 256], strides = [1, 1]} : vector<8x256xf32> to vector<1x256xf32>
    %62 = vector.broadcast %61 : vector<1x256xf32> to vector<8x256xf32>
    %63 = arith.mulf %60, %62 : vector<8x256xf32>
    %c241_i32_15 = arith.constant 241 : i32
    %64 = tpu.dynamic_rotate %43 by %c241_i32_15 dim 1 : vector<8x256xf32>, i32 -> vector<8x256xf32>
    %65 = vector.extract_strided_slice %4 {offsets = [5, 0], sizes = [1, 256], strides = [1, 1]} : vector<8x256xf32> to vector<1x256xf32>
    %66 = vector.broadcast %65 : vector<1x256xf32> to vector<8x256xf32>
    %67 = arith.mulf %64, %66 : vector<8x256xf32>
    %c240_i32_16 = arith.constant 240 : i32
    %68 = tpu.dynamic_rotate %43 by %c240_i32_16 dim 1 : vector<8x256xf32>, i32 -> vector<8x256xf32>
    %69 = vector.extract_strided_slice %4 {offsets = [6, 0], sizes = [1, 256], strides = [1, 1]} : vector<8x256xf32> to vector<1x256xf32>
    %70 = vector.broadcast %69 : vector<1x256xf32> to vector<8x256xf32>
    %71 = arith.mulf %68, %70 : vector<8x256xf32>
    %c239_i32_17 = arith.constant 239 : i32
    %72 = tpu.dynamic_rotate %43 by %c239_i32_17 dim 1 : vector<8x256xf32>, i32 -> vector<8x256xf32>
    %73 = vector.extract_strided_slice %4 {offsets = [7, 0], sizes = [1, 256], strides = [1, 1]} : vector<8x256xf32> to vector<1x256xf32>
    %74 = vector.broadcast %73 : vector<1x256xf32> to vector<8x256xf32>
    %75 = arith.mulf %72, %74 : vector<8x256xf32>
    %76 = tpu.concatenate %47, %51, %55, %59, %43, %63, %67, %71, %75 in 0 : vector<8x256xf32>, vector<8x256xf32>, vector<8x256xf32>, vector<8x256xf32>, vector<8x256xf32>, vector<8x256xf32>, vector<8x256xf32>, vector<8x256xf32>, vector<8x256xf32> -> vector<72x256xf32>
    %cst_18 = arith.constant dense<0.000000e+00> : vector<8x256xf32>
    %77 = tpu.matmul %2, %76, %cst_18 {dimension_numbers = #tpu.dot_dimension_numbers<[1], [0], [0], [1], [0, 0, 1, 1], [], []>} : vector<8x72xf32>, vector<72x256xf32>, vector<8x256xf32> -> vector<8x256xf32>
    %78 = vector.extract_strided_slice %3 {offsets = [0, 1], sizes = [8, 1], strides = [1, 1]} : vector<8x2xf32> to vector<8x1xf32>
    %79 = vector.broadcast %78 : vector<8x1xf32> to vector<8x256xf32>
    %80 = arith.addf %77, %79 : vector<8x256xf32>
    %81 = arith.addf %0, %80 : vector<8x256xf32>
    %c0_19 = arith.constant 0 : index
    %c0_20 = arith.constant 0 : index
    %82 = vector.load %arg6[%c0_19, %c0_20] : memref<8x256xf32, #tpu.memory_space<vmem>>, vector<8x256xf32>
    tpu.vector_store %arg6[%c0_19, %c0_20], %81 {strides = array<i32>} : memref<8x256xf32, #tpu.memory_space<vmem>>, vector<8x256xf32>,
    return
  }
  func.func @transform_0(%arg0: i32) -> (i32, i32) {
    %c0_i32 = arith.constant 0 : i32
    %c0_i32_0 = arith.constant 0 : i32
    return %arg0, %c0_i32 : i32, i32
  }
  func.func @transform_1(%arg0: i32) -> (i32, i32) {
    %c0_i32 = arith.constant 0 : i32
    %c0_i32_0 = arith.constant 0 : i32
    %c0_i32_1 = arith.constant 0 : i32
    return %c0_i32, %c0_i32_0 : i32, i32
  }
  func.func @transform_2(%arg0: i32) -> (i32, i32) {
    %c0_i32 = arith.constant 0 : i32
    %c0_i32_0 = arith.constant 0 : i32
    %c0_i32_1 = arith.constant 0 : i32
    return %c0_i32, %c0_i32_0 : i32, i32
  }
  func.func @transform_3(%arg0: i32) -> (i32, i32) {
    %c0_i32 = arith.constant 0 : i32
    %c0_i32_0 = arith.constant 0 : i32
    %c0_i32_1 = arith.constant 0 : i32
    return %c0_i32, %c0_i32_0 : i32, i32
  }
  func.func @transform_4(%arg0: i32) -> (i32, i32) {
    %c0_i32 = arith.constant 0 : i32
    %c0_i32_0 = arith.constant 0 : i32
    %c0_i32_1 = arith.constant 0 : i32
    return %c0_i32, %c0_i32_0 : i32, i32
  }
  func.func @transform_5(%arg0: i32) -> (i32, i32) {
    %c0_i32 = arith.constant 0 : i32
    %c0_i32_0 = arith.constant 0 : i32
    return %arg0, %c0_i32 : i32, i32
  }
}

</mosaic_0001>

<llo_original>
// kernel: tpu_custom_call.1
$region0: #{tpu_custom_call.1}
  #allocation0 [shape = 'u32[]', space=smem, size = 0x4, offset = 0x4, fixed_abs, tag = 'smem constant byte address 0x4 - core index']
  #allocation1 [shape = 'u32[144,128]{1,0:T(1,128)}', space=vmem, size = 0x12000, scoped, tag = 'internal scratch']
  %s0 = inlined_call_operand.hbm [shape: f32[8,256], index: 0, kind: input, shape index: {}]
  %s1 = inlined_call_operand.vmem [shape: f32[8,72], index: 1, kind: input, shape index: {}]
  %s2 = inlined_call_operand.hbm [shape: f32[8,72], index: 2, kind: input, shape index: {}]
  %s3 = inlined_call_operand.vmem [shape: f32[8,2], index: 3, kind: input, shape index: {}]
  %s4 = inlined_call_operand.vmem [shape: f32[8,256], index: 4, kind: input, shape index: {}]
  %s5 = inlined_call_operand.hbm [shape: f32[8,256], index: 5, kind: output, shape index: {}]
  %s6 = sld [smem:[#allocation0]]
  $region38: #{tpu_custom_call.1} parent=0
    _
  %s8 = ssub.s32 1, %s6
  %s9 = scalar_select 0, %s8, %s6
  $region1: #{tpu_custom_call.1} parent=0
    #allocation2 [shape = 'u8[8192]{0}', space=vmem, size = 0x2000, scoped, tag = 'input window, operand 0, single buffered']
    #allocation3 [shape = 's32[1]{0}', space=sflag, size = 0x4, scoped, tag = 'scoped memory for tpu_custom_call.1']
    #allocation4 [shape = 's32[1]{0}', space=sflag, size = 0x4, scoped, tag = 'scoped memory for tpu_custom_call.1']
    #allocation5 [shape = 'u8[4096]{0}', space=vmem, size = 0x1000, scoped, tag = 'input window, operand 2, single buffered']
    #allocation6 [shape = 's32[1]{0}', space=sflag, size = 0x4, scoped, tag = 'scoped memory for tpu_custom_call.1']
    #allocation7 [shape = 'u8[8192]{0}', space=vmem, size = 0x2000, scoped, tag = 'output window, operand 0, single buffered']
    %10 = vsyncpa [#allocation3], 0
    %11 = vsyncpa [#allocation6], 0
    %12 = vsyncpa [#allocation4], 0
    // Predicated region
    $region2: #{tpu_custom_call.1} parent=1 // pred_check
      _
    $region3: #{tpu_custom_call.1} parent=1 // pred_check_branch
      %14 = sbr.rel (0) target = $region5
    $region4: #{tpu_custom_call.1} parent=1 // pred_region
      %s16 = ssub.s32 256, 256
      %17 = vsyncadd [#allocation3], %s16
      %s19 = sshll.u32 [#allocation2], 4
      %s20 = int_to_ptr.vmem [resolvable:$true] %s19
      %22 = dma.hbm_to_vmem [thread:$0]  %s0, 256, %s20, [#allocation3]
    $region5: #{tpu_custom_call.1} parent=1 // pred_fallthru
      _
    // Predicated region
    $region6: #{tpu_custom_call.1} parent=1 // pred_check
      _
    $region7: #{tpu_custom_call.1} parent=1 // pred_check_branch
      %24 = sbr.rel (0) target = $region9
    $region8: #{tpu_custom_call.1} parent=1 // pred_region
      _
    $region9: #{tpu_custom_call.1} parent=1 // pred_fallthru
      _
    // Predicated region
    $region10: #{tpu_custom_call.1} parent=1 // pred_check
      _
    $region11: #{tpu_custom_call.1} parent=1 // pred_check_branch
      %26 = sbr.rel (0) target = $region13
    $region12: #{tpu_custom_call.1} parent=1 // pred_region
      %s28 = ssub.s32 128, 128
      %29 = vsyncadd [#allocation6], %s28
      %s31 = sshll.u32 [#allocation5], 4
      %s32 = int_to_ptr.vmem [resolvable:$true] %s31
      %34 = dma.hbm_to_vmem [thread:$0]  %s2, 128, %s32, [#allocation6]
    $region13: #{tpu_custom_call.1} parent=1 // pred_fallthru
      _
    // Predicated region
    $region14: #{tpu_custom_call.1} parent=1 // pred_check
      _
    $region15: #{tpu_custom_call.1} parent=1 // pred_check_branch
      %36 = sbr.rel (0) target = $region17
    $region16: #{tpu_custom_call.1} parent=1 // pred_region
      _
    $region17: #{tpu_custom_call.1} parent=1 // pred_fallthru
      _
    // Predicated region
    $region18: #{tpu_custom_call.1} parent=1 // pred_check
      _
    $region19: #{tpu_custom_call.1} parent=1 // pred_check_branch
      %38 = sbr.rel (0) target = $region21
    $region20: #{tpu_custom_call.1} parent=1 // pred_region
      _
    $region21: #{tpu_custom_call.1} parent=1 // pred_fallthru
      _
    // Predicated region
    $region22: #{tpu_custom_call.1} parent=1 // pred_check
      _
    $region23: #{tpu_custom_call.1} parent=1 // pred_check_branch
      %40 = sbr.rel (0) target = $region25
    $region24: #{tpu_custom_call.1} parent=1 // pred_region
      %41 = dma.done [#allocation3], 256
    $region25: #{tpu_custom_call.1} parent=1 // pred_fallthru
      _
    // Predicated region
    $region26: #{tpu_custom_call.1} parent=1 // pred_check
      _
    $region27: #{tpu_custom_call.1} parent=1 // pred_check_branch
      %43 = sbr.rel (0) target = $region29
    $region28: #{tpu_custom_call.1} parent=1 // pred_region
      %44 = dma.done [#allocation6], 128
    $region29: #{tpu_custom_call.1} parent=1 // pred_fallthru
      _
    %v45 = vld [vmem:[#allocation2] sm:$0xff]
    %v46 = vld [vmem:[#allocation2 + $0x8] sm:$0xff]
    %v47 = vld [vmem:[%s1] sm:$0xff]
    %v48 = vld [vmem:[#allocation5] sm:$0xff]
    %v49 = vld [vmem:[%s3] sm:$0xff]
    %v50 = vld [vmem:[%s4] sm:$0xff]
    %v51 = vld [vmem:[%s4 + $0x8] sm:$0xff]
    %52 = vrot.lane.b32.xlu0 %v45, 17
    %v53 = vpop.permute.xlu0 %52
    %54 = vrot.lane.b32.xlu0 %v46, 17
    %v55 = vpop.permute.xlu0 %54
    %v56 = vlaneseq
    %v57 = vand.u32 %v56, 127
    %vm58 = vcmp.lt.s32.totalorder %v57, 17
    %v59 = vsel %vm58, %v53, %v55
    %v60 = vsel %vm58, %v55, %v53
    %v61 = vlaneseq
    %v62 = vshrl.u32 %v61, 7
    %v63 = vsub.s32 0, %v62
    %v64 = vrot.slane %v50, %v63
    %v65 = vlaneseq
    %v66 = vshrl.u32 %v65, 7
    %v67 = vsub.s32 0, %v66
    %v68 = vrot.slane %v51, %v67
    %v69 = vmul.f32 %v60, %v64
    %v70 = vmul.f32 %v59, %v68
    %71 = vrot.lane.b32.xlu0 %v45, 16
    %v72 = vpop.permute.xlu0 %71
    %73 = vrot.lane.b32.xlu0 %v46, 16
    %v74 = vpop.permute.xlu0 %73
    %vm75 = vcmp.lt.s32.totalorder %v57, 16
    %v76 = vsel %vm75, %v72, %v74
    %v77 = vsel %vm75, %v74, %v72
    %v78 = vlaneseq
    %v79 = vshrl.u32 %v78, 7
    %v80 = vsub.s32 1, %v79
    %v81 = vrot.slane %v50, %v80
    %v82 = vlaneseq
    %v83 = vshrl.u32 %v82, 7
    %v84 = vsub.s32 1, %v83
    %v85 = vrot.slane %v51, %v84
    %v86 = vmul.f32 %v77, %v81
    %v87 = vmul.f32 %v76, %v85
    %88 = vrot.lane.b32.xlu0 %v45, 15
    %v89 = vpop.permute.xlu0 %88
    %90 = vrot.lane.b32.xlu0 %v46, 15
    %v91 = vpop.permute.xlu0 %90
    %vm92 = vcmp.lt.s32.totalorder %v57, 15
    %v93 = vsel %vm92, %v89, %v91
    %v94 = vsel %vm92, %v91, %v89
    %v95 = vlaneseq
    %v96 = vshrl.u32 %v95, 7
    %v97 = vsub.s32 2, %v96
    %v98 = vrot.slane %v50, %v97
    %v99 = vlaneseq
    %v100 = vshrl.u32 %v99, 7
    %v101 = vsub.s32 2, %v100
    %v102 = vrot.slane %v51, %v101
    %v103 = vmul.f32 %v94, %v98
    %v104 = vmul.f32 %v93, %v102
    %105 = vrot.lane.b32.xlu0 %v45, 1
    %v106 = vpop.permute.xlu0 %105
    %107 = vrot.lane.b32.xlu0 %v46, 1
    %v108 = vpop.permute.xlu0 %107
    %vm109 = vcmp.lt.s32.totalorder %v57, 1
    %v110 = vsel %vm109, %v106, %v108
    %v111 = vsel %vm109, %v108, %v106
    %v112 = vlaneseq
    %v113 = vshrl.u32 %v112, 7
    %v114 = vsub.s32 3, %v113
    %v115 = vrot.slane %v50, %v114
    %v116 = vlaneseq
    %v117 = vshrl.u32 %v116, 7
    %v118 = vsub.s32 3, %v117
    %v119 = vrot.slane %v51, %v118
    %v120 = vmul.f32 %v111, %v115
    %v121 = vmul.f32 %v110, %v119
    %122 = vrot.lane.b32.xlu0 %v45, 127
    %v123 = vpop.permute.xlu0 %122
    %124 = vrot.lane.b32.xlu0 %v46, 127
    %v125 = vpop.permute.xlu0 %124
    %vm126 = vcmp.lt.s32.totalorder %v57, 127
    %v127 = vsel %vm126, %v123, %v125
    %v128 = vsel %vm126, %v125, %v123
    %v129 = vlaneseq
    %v130 = vshrl.u32 %v129, 7
    %v131 = vsub.s32 4, %v130
    %v132 = vrot.slane %v50, %v131
    %v133 = vlaneseq
    %v134 = vshrl.u32 %v133, 7
    %v135 = vsub.s32 4, %v134
    %v136 = vrot.slane %v51, %v135
    %v137 = vmul.f32 %v127, %v132
    %v138 = vmul.f32 %v128, %v136
    %139 = vrot.lane.b32.xlu0 %v45, 113
    %v140 = vpop.permute.xlu0 %139
    %141 = vrot.lane.b32.xlu0 %v46, 113
    %v142 = vpop.permute.xlu0 %141
    %vm143 = vcmp.lt.s32.totalorder %v57, 113
    %v144 = vsel %vm143, %v140, %v142
    %v145 = vsel %vm143, %v142, %v140
    %v146 = vlaneseq
    %v147 = vshrl.u32 %v146, 7
    %v148 = vsub.s32 5, %v147
    %v149 = vrot.slane %v50, %v148
    %v150 = vlaneseq
    %v151 = vshrl.u32 %v150, 7
    %v152 = vsub.s32 5, %v151
    %v153 = vrot.slane %v51, %v152
    %v154 = vmul.f32 %v144, %v149
    %v155 = vmul.f32 %v145, %v153
    %156 = vrot.lane.b32.xlu0 %v45, 112
    %v157 = vpop.permute.xlu0 %156
    %158 = vrot.lane.b32.xlu0 %v46, 112
    %v159 = vpop.permute.xlu0 %158
    %vm160 = vcmp.lt.s32.totalorder %v57, 112
    %v161 = vsel %vm160, %v157, %v159
    %v162 = vsel %vm160, %v159, %v157
    %v163 = vlaneseq
    %v164 = vshrl.u32 %v163, 7
    %v165 = vsub.s32 6, %v164
    %v166 = vrot.slane %v50, %v165
    %v167 = vlaneseq
    %v168 = vshrl.u32 %v167, 7
    %v169 = vsub.s32 6, %v168
    %v170 = vrot.slane %v51, %v169
    %v171 = vmul.f32 %v161, %v166
    %v172 = vmul.f32 %v162, %v170
    %173 = vrot.lane.b32.xlu0 %v45, 111
    %v174 = vpop.permute.xlu0 %173
    %175 = vrot.lane.b32.xlu0 %v46, 111
    %v176 = vpop.permute.xlu0 %175
    %vm177 = vcmp.lt.s32.totalorder %v57, 111
    %v178 = vsel %vm177, %v174, %v176
    %v179 = vsel %vm177, %v176, %v174
    %v180 = vlaneseq
    %v181 = vshrl.u32 %v180, 7
    %v182 = vsub.s32 7, %v181
    %v183 = vrot.slane %v50, %v182
    %v184 = vlaneseq
    %v185 = vshrl.u32 %v184, 7
    %v186 = vsub.s32 7, %v185
    %v187 = vrot.slane %v51, %v186
    %v188 = vmul.f32 %v178, %v183
    %v189 = vmul.f32 %v179, %v187
    %191 = vset.pattern.permute.xlu0 0
    %192 = vperm.xlu0 %191, %v49
    %v193 = vpop.permute.xlu0 %192
    %vm195 = vcmask 588800
    %v197 = vsel %vm195, %v47, 0
    %199 = vmatprep.subr.mxu0 %v70
    %200 = vmatpush1.msra.mxu0 %v69
    %201 = vmatprep.subr.mxu0 %v87
    %202 = vmatpush1.msra.mxu0 %v86
    %203 = vmatprep.subr.mxu0 %v104
    %204 = vmatpush1.msra.mxu0 %v103
    %205 = vmatprep.subr.mxu0 %v121
    %206 = vmatpush1.msra.mxu0 %v120
    %207 = vmatprep.subr.mxu0 %v46
    %208 = vmatpush1.msra.mxu0 %v45
    %209 = vmatprep.subr.mxu0 %v138
    %210 = vmatpush1.msra.mxu0 %v137
    %211 = vmatprep.subr.mxu0 %v155
    %212 = vmatpush1.msra.mxu0 %v154
    %213 = vmatprep.subr.mxu0 %v172
    %214 = vmatpush1.msra.mxu0 %v171
    %215 = vmatprep.subr.mxu0 %v189
    %216 = vmatpush1.msra.mxu0 %v188
    %217 = vmatprep.subr.mxu0 0.0
    %218 = vmatpush1.msra.mxu0 0.0
    %219 = vmatprep.subr.mxu0 0.0
    %220 = vmatpush1.msra.mxu0 0.0
    %221 = vmatprep.subr.mxu0 0.0
    %222 = vmatpush1.msra.mxu0 0.0
    %223 = vmatprep.subr.mxu0 0.0
    %224 = vmatpush1.msra.mxu0 0.0
    %225 = vmatprep.subr.mxu0 0.0
    %226 = vmatpush1.msra.mxu0 0.0
    %227 = vmatprep.subr.mxu0 0.0
    %228 = vmatpush1.msra.mxu0 0.0
    %229 = vmatprep.subr.mxu0 0.0
    %230 = vmatpush1.msra.mxu0 0.0
    %231 = vmatprep.subr.mxu0 0.0
    %232 = vmatpush1.msra.mxu0 0.0
    %233 = vmatprep.subr.mxu0 0.0
    %234 = vmatpush1.msra.mxu0 0.0
    %235 = vmatprep.subr.mxu0 0.0
    %236 = vmatpush1.msra.mxu0 0.0
    %237 = vmatprep.subr.mxu0 0.0
    %238 = vmatpush1.msra.mxu0 0.0
    %239 = vmatprep.subr.mxu0 0.0
    %240 = vmatpush1.msra.mxu0 0.0
    %241 = vmatprep.subr.mxu0 0.0
    %242 = vmatpush1.msra.mxu0 0.0
    %243 = vmatprep.subr.mxu0 0.0
    %244 = vmatpush1.msra.mxu0 0.0
    %245 = vmatprep.subr.mxu0 0.0
    %246 = vmatpush1.msra.mxu0 0.0
    %247 = vmatprep.subr.mxu0 0.0
    %248 = vmatpush1.msra.mxu0 0.0
    %249 = vmatprep.subr.mxu0 0.0
    %250 = vmatpush1.msra.mxu0 0.0
    %251 = vmatprep.subr.mxu0 0.0
    %252 = vmatpush1.msra.mxu0 0.0
    %253 = vmatprep.subr.mxu0 0.0
    %254 = vmatpush1.msra.mxu0 0.0
    %255 = vmatprep.subr.mxu0 0.0
    %256 = vmatpush1.msra.mxu0 0.0
    %257 = vmatprep.subr.mxu0 0.0
    %258 = vmatpush1.msra.mxu0 0.0
    %259 = vmatprep.subr.mxu0 0.0
    %260 = vmatpush1.msra.mxu0 0.0
    %261 = vmatprep.subr.mxu0 0.0
    %262 = vmatpush1.msra.mxu0 0.0
    %263 = vmatprep.mubr.f32.mxu0 0.0
    %264 = vmatmul.mubr.f32.gmra.mrb[0].mxu0 %v197
    %v265 = vpop.f32.mrb[0].mxu0
    %v266 = vadd.f32 %v193, %v265
    %v267 = vpop.f32.mrb[0].mxu0
    %v268 = vadd.f32 %v193, %v267
    %269 = vdwg.mxu0
    %v270 = vmax.f32 %v266, 0.0
    %v271 = vmax.f32 %v268, 0.0
    %272 = vrot.lane.b32.xlu0 %v270, 17
    %v273 = vpop.permute.xlu0 %272
    %274 = vrot.lane.b32.xlu0 %v271, 17
    %v275 = vpop.permute.xlu0 %274
    %v276 = vsel %vm58, %v273, %v275
    %v277 = vsel %vm58, %v275, %v273
    %v278 = vmul.f32 %v277, %v64
    %v279 = vmul.f32 %v276, %v68
    %280 = vrot.lane.b32.xlu0 %v270, 16
    %v281 = vpop.permute.xlu0 %280
    %282 = vrot.lane.b32.xlu0 %v271, 16
    %v283 = vpop.permute.xlu0 %282
    %v284 = vsel %vm75, %v281, %v283
    %v285 = vsel %vm75, %v283, %v281
    %v286 = vmul.f32 %v285, %v81
    %v287 = vmul.f32 %v284, %v85
    %288 = vrot.lane.b32.xlu0 %v270, 15
    %v289 = vpop.permute.xlu0 %288
    %290 = vrot.lane.b32.xlu0 %v271, 15
    %v291 = vpop.permute.xlu0 %290
    %v292 = vsel %vm92, %v289, %v291
    %v293 = vsel %vm92, %v291, %v289
    %v294 = vmul.f32 %v293, %v98
    %v295 = vmul.f32 %v292, %v102
    %296 = vrot.lane.b32.xlu0 %v270, 1
    %v297 = vpop.permute.xlu0 %296
    %298 = vrot.lane.b32.xlu0 %v271, 1
    %v299 = vpop.permute.xlu0 %298
    %v300 = vsel %vm109, %v297, %v299
    %v301 = vsel %vm109, %v299, %v297
    %v302 = vmul.f32 %v301, %v115
    %v303 = vmul.f32 %v300, %v119
    %304 = vrot.lane.b32.xlu0 %v270, 127
    %v305 = vpop.permute.xlu0 %304
    %306 = vrot.lane.b32.xlu0 %v271, 127
    %v307 = vpop.permute.xlu0 %306
    %v308 = vsel %vm126, %v305, %v307
    %v309 = vsel %vm126, %v307, %v305
    %v310 = vmul.f32 %v308, %v132
    %v311 = vmul.f32 %v309, %v136
    %312 = vrot.lane.b32.xlu0 %v270, 113
    %v313 = vpop.permute.xlu0 %312
    %314 = vrot.lane.b32.xlu0 %v271, 113
    %v315 = vpop.permute.xlu0 %314
    %v316 = vsel %vm143, %v313, %v315
    %v317 = vsel %vm143, %v315, %v313
    %v318 = vmul.f32 %v316, %v149
    %v319 = vmul.f32 %v317, %v153
    %320 = vrot.lane.b32.xlu0 %v270, 112
    %v321 = vpop.permute.xlu0 %320
    %322 = vrot.lane.b32.xlu0 %v271, 112
    %v323 = vpop.permute.xlu0 %322
    %v324 = vsel %vm160, %v321, %v323
    %v325 = vsel %vm160, %v323, %v321
    %v326 = vmul.f32 %v324, %v166
    %v327 = vmul.f32 %v325, %v170
    %328 = vrot.lane.b32.xlu0 %v270, 111
    %v329 = vpop.permute.xlu0 %328
    %330 = vrot.lane.b32.xlu0 %v271, 111
    %v331 = vpop.permute.xlu0 %330
    %v332 = vsel %vm177, %v329, %v331
    %v333 = vsel %vm177, %v331, %v329
    %v334 = vmul.f32 %v332, %v183
    %v335 = vmul.f32 %v333, %v187
    %336 = vset.pattern.permute.xlu0 1
    %337 = vperm.xlu0 %336, %v49
    %v338 = vpop.permute.xlu0 %337
    %v341 = vsel %vm195, %v48, 0
    %343 = vmatprep.subr.mxu0 %v279
    %344 = vmatpush1.msra.mxu0 %v278
    %345 = vmatprep.subr.mxu0 %v287
    %346 = vmatpush1.msra.mxu0 %v286
    %347 = vmatprep.subr.mxu0 %v295
    %348 = vmatpush1.msra.mxu0 %v294
    %349 = vmatprep.subr.mxu0 %v303
    %350 = vmatpush1.msra.mxu0 %v302
    %351 = vmatprep.subr.mxu0 %v271
    %352 = vmatpush1.msra.mxu0 %v270
    %353 = vmatprep.subr.mxu0 %v311
    %354 = vmatpush1.msra.mxu0 %v310
    %355 = vmatprep.subr.mxu0 %v319
    %356 = vmatpush1.msra.mxu0 %v318
    %357 = vmatprep.subr.mxu0 %v327
    %358 = vmatpush1.msra.mxu0 %v326
    %359 = vmatprep.subr.mxu0 %v335
    %360 = vmatpush1.msra.mxu0 %v334
    %361 = vmatprep.subr.mxu0 0.0
    %362 = vmatpush1.msra.mxu0 0.0
    %363 = vmatprep.subr.mxu0 0.0
    %364 = vmatpush1.msra.mxu0 0.0
    %365 = vmatprep.subr.mxu0 0.0
    %366 = vmatpush1.msra.mxu0 0.0
    %367 = vmatprep.subr.mxu0 0.0
    %368 = vmatpush1.msra.mxu0 0.0
    %369 = vmatprep.subr.mxu0 0.0
    %370 = vmatpush1.msra.mxu0 0.0
    %371 = vmatprep.subr.mxu0 0.0
    %372 = vmatpush1.msra.mxu0 0.0
    %373 = vmatprep.subr.mxu0 0.0
    %374 = vmatpush1.msra.mxu0 0.0
    %375 = vmatprep.subr.mxu0 0.0
    %376 = vmatpush1.msra.mxu0 0.0
    %377 = vmatprep.subr.mxu0 0.0
    %378 = vmatpush1.msra.mxu0 0.0
    %379 = vmatprep.subr.mxu0 0.0
    %380 = vmatpush1.msra.mxu0 0.0
    %381 = vmatprep.subr.mxu0 0.0
    %382 = vmatpush1.msra.mxu0 0.0
    %383 = vmatprep.subr.mxu0 0.0
    %384 = vmatpush1.msra.mxu0 0.0
    %385 = vmatprep.subr.mxu0 0.0
    %386 = vmatpush1.msra.mxu0 0.0
    %387 = vmatprep.subr.mxu0 0.0
    %388 = vmatpush1.msra.mxu0 0.0
    %389 = vmatprep.subr.mxu0 0.0
    %390 = vmatpush1.msra.mxu0 0.0
    %391 = vmatprep.subr.mxu0 0.0
    %392 = vmatpush1.msra.mxu0 0.0
    %393 = vmatprep.subr.mxu0 0.0
    %394 = vmatpush1.msra.mxu0 0.0
    %395 = vmatprep.subr.mxu0 0.0
    %396 = vmatpush1.msra.mxu0 0.0
    %397 = vmatprep.subr.mxu0 0.0
    %398 = vmatpush1.msra.mxu0 0.0
    %399 = vmatprep.subr.mxu0 0.0
    %400 = vmatpush1.msra.mxu0 0.0
    %401 = vmatprep.subr.mxu0 0.0
    %402 = vmatpush1.msra.mxu0 0.0
    %403 = vmatprep.subr.mxu0 0.0
    %404 = vmatpush1.msra.mxu0 0.0
    %405 = vmatprep.subr.mxu0 0.0
    %406 = vmatpush1.msra.mxu0 0.0
    %407 = vmatprep.mubr.f32.mxu0 0.0
    %408 = vmatmul.mubr.f32.gmra.mrb[0].mxu0 %v341
    %v409 = vpop.f32.mrb[0].mxu0
    %v410 = vadd.f32 %v338, %v409
    %v411 = vpop.f32.mrb[0].mxu0
    %v412 = vadd.f32 %v338, %v411
    %413 = vdwg.mxu0
    %v414 = vadd.f32 %v45, %v410
    %v415 = vadd.f32 %v46, %v412
    %416 = vst [vmem:[#allocation7] sm:$0xff] %v414
    %417 = vst [vmem:[#allocation7 + $0x8] sm:$0xff] %v415
    // Predicated region
    $region30: #{tpu_custom_call.1} parent=1 // pred_check
      _
    $region31: #{tpu_custom_call.1} parent=1 // pred_check_branch
      %419 = sbr.rel (0) target = $region33
    $region32: #{tpu_custom_call.1} parent=1 // pred_region
      %s421 = ssub.s32 256, 256
      %422 = vsyncadd [#allocation4], %s421
      %s424 = sshll.u32 [#allocation7], 4
      %s425 = int_to_ptr.vmem [resolvable:$true] %s424
      %427 = dma.vmem_to_hbm [thread:$0]  %s425, 256, %s5, [#allocation4]
    $region33: #{tpu_custom_call.1} parent=1 // pred_fallthru
      _
    // Predicated region
    $region34: #{tpu_custom_call.1} parent=1 // pred_check
      _
    $region35: #{tpu_custom_call.1} parent=1 // pred_check_branch
      %429 = sbr.rel (0) target = $region37
    $region36: #{tpu_custom_call.1} parent=1 // pred_region
      %430 = dma.done [#allocation4], 256
    $region37: #{tpu_custom_call.1} parent=1 // pred_fallthru
      _
    %431 = vsyncpa [#allocation3], 1
    %432 = vsyncpa [#allocation6], 1
    %433 = vsyncpa [#allocation4], 1

</llo_original>
